<compile_context>
chip_gen: v5e
topology: v5e:2x2
jax: 0.10.0
libtpu: 0.0.40
codegen_flags: <defaults>
</compile_context>

<pallas_src>
import functools

import jax
import jax.numpy as jnp
from jax.experimental import pallas as pl
from jax.experimental.pallas import tpu as pltpu


def _round_up(v, m):
    return (v + m - 1) // m * m


# ----------------------------- fused Pallas kernel -----------------------------

def _mlp_fused_kernel(*refs, n_layers, emit_hidden):
    """refs = (x, w0, b0, w1, b1, ..., w_{L-1}, b_{L-1}, out[, h_out]).

    x, w* are bf16; b* are f32; accumulation is f32 on the MXU.
    Layers 0..L-2 get a fused ReLU; layer L-1 is the head (no ReLU).
    """
    x_ref = refs[0]
    out_ref = refs[1 + 2 * n_layers]
    h_out_ref = refs[2 + 2 * n_layers] if emit_hidden else None

    h = x_ref[...]                                   # (tm, D_pad) bf16
    for i in range(n_layers):
        w_ref = refs[1 + 2 * i]                      # (din_pad, dout_pad) bf16
        b_ref = refs[2 + 2 * i]                      # (1, dout_pad) f32
        acc = jnp.dot(h, w_ref[...], preferred_element_type=jnp.float32)
        acc = acc + b_ref[...]                       # bias + ReLU in f32
        if i < n_layers - 1:
            acc = jnp.maximum(acc, 0.0)
            if emit_hidden and i == n_layers - 2:
                h_out_ref[...] = acc.astype(jnp.bfloat16)   # final hidden, bf16
            h = acc.astype(jnp.bfloat16)             # back to bf16 for next MXU op
        else:
            out_ref[...] = acc.astype(out_ref.dtype)


# -------------------------- tile / VMEM budget selection --------------------------

def _select_tile_and_vmem(B8, dims, emit_hidden):
    """Pick row tile tm (divisor of B8, multiple of 8) and a vmem_limit_bytes."""
    try:
        vmem_cap = int(pltpu.get_tpu_info().vmem_capacity_bytes)
    except Exception:
        vmem_cap = 64 * 1024 * 1024   # v7x per-TC VMEM (most restrictive gen)

    n_layers = len(dims) - 1
    # Resident (single-buffered) weights + biases.
    resident = sum(dims[i] * dims[i + 1] * 2 + dims[i + 1] * 4
                   for i in range(n_layers))
    # Per-row VMEM: x tile (bf16, double buffered) + out tile (f32, double buffered)
    # + optional hidden tile (bf16, double buffered) + f32 intermediates / temps.
    per_row = 2 * dims[0] * 2 + 2 * dims[-1] * 4
    if emit_hidden:
        per_row += 2 * dims[-2] * 2
    per_row += 2 * max(dims) * 4

    budget = int(vmem_cap * 0.6)                      # headroom for compiler scratch
    rows = max(8, (budget - resident) // max(per_row, 1))
    rows = (rows // 8) * 8
    cap = max(8, min(rows, 1024, B8))
    if B8 > 256:
        # Keep >= 2 grid steps so both v7x TensorCores get work (free on v5e/v6e).
        cap = min(cap, max(8, (B8 // 2) // 8 * 8))

    tm = 8
    for cand in range(cap, 7, -8):
        if B8 % cand == 0:
            tm = cand
            break

    needed = resident + tm * per_row + (4 << 20)
    vmem_limit = int(min(vmem_cap, max(needed, 32 << 20)))
    return tm, vmem_limit


# ------------------------------ jitted fused forward ------------------------------

@functools.partial(jax.jit,
                   static_argnames=("dims", "out_dim", "hid_dim", "emit_hidden"))
def mlp_forward_pallas(x_flat, *packed, dims, out_dim, hid_dim, emit_hidden=False):
    """Fused MLP forward in ONE pallas_call.

    packed = (w0_p, b0_p, w1_p, b1_p, ...): pre-padded bf16 weights / f32 biases.
    dims   = padded layer widths (multiples of 128), dims[0] = padded input width.
    Returns (B, out_dim) f32 (and (B, hid_dim) bf16 final hidden if emit_hidden).
    """
    n_layers = len(dims) - 1
    B, D = x_flat.shape
    D_pad = dims[0]

    # Batch padded only to the sublane multiple (8); tm divides B8 exactly.
    B8 = _round_up(max(B, 1), 8)
    x_p = x_flat.astype(jnp.bfloat16)
    if B8 != B or D_pad != D:
        x_p = jnp.pad(x_p, ((0, B8 - B), (0, D_pad - D)))

    tm, vmem_limit = _select_tile_and_vmem(B8, dims, emit_hidden)
    grid = (B8 // tm,)

    # BlockSpecs: x/out tiled over batch; weights/biases resident & single-buffered.
    in_specs = [pl.BlockSpec((tm, dims[0]), lambda i: (i, 0))]
    for li in range(n_layers):
        din_p, dout_p = dims[li], dims[li + 1]
        in_specs.append(pl.BlockSpec((din_p, dout_p), lambda i: (0, 0),
                                     pipeline_mode=pl.Buffered(1)))
        in_specs.append(pl.BlockSpec((1, dout_p), lambda i: (0, 0),
                                     pipeline_mode=pl.Buffered(1)))

    out_specs = [pl.BlockSpec((tm, dims[-1]), lambda i: (i, 0))]
    out_shape = [jax.ShapeDtypeStruct((B8, dims[-1]), jnp.float32)]
    if emit_hidden:
        out_specs.append(pl.BlockSpec((tm, dims[-2]), lambda i: (i, 0)))
        out_shape.append(jax.ShapeDtypeStruct((B8, dims[-2]), jnp.bfloat16))

    # Advisory cost estimate so XLA schedules the surrounding cast/slice ops around us.
    flops = 2 * B8 * sum(dims[i] * dims[i + 1] for i in range(n_layers))
    bytes_accessed = (B8 * dims[0] * 2
                      + sum(dims[i] * dims[i + 1] * 2 + dims[i + 1] * 4
                            for i in range(n_layers))
                      + B8 * dims[-1] * 4
                      + (B8 * dims[-2] * 2 if emit_hidden else 0))
    cost = pl.CostEstimate(flops=flops, transcendentals=0,
                           bytes_accessed=bytes_accessed)

    kernel = functools.partial(_mlp_fused_kernel, n_layers=n_layers,
                               emit_hidden=emit_hidden)
    outs = pl.pallas_call(
        kernel,
        out_shape=tuple(out_shape),
        grid=grid,
        in_specs=in_specs,
        out_specs=tuple(out_specs),
        compiler_params=pltpu.CompilerParams(
            dimension_semantics=("parallel",),   # batch axis: megacore-shardable
            vmem_limit_bytes=vmem_limit,
        ),
        cost_estimate=cost,
    )(x_p, *packed)

    out = outs[0][:B, :out_dim]
    if emit_hidden:
        return out, outs[1][:B, :hid_dim]
    return out


# --------------------------------- MLP wrapper ---------------------------------

class MLPPallas:
    def __init__(self, feature_size, hidden_dim, num_classes, num_layer=3,
                 adv=False, adv_lambda=1.0, key=None):
        try:
            in_features = 1
            for s in feature_size:
                in_features *= s
        except TypeError:
            in_features = feature_size
        self.adv = adv
        self.adv_lambda = adv_lambda
        self.num_layer = num_layer
        self.in_features = in_features
        self.out_dim = num_classes

        if key is None:
            key = jax.random.PRNGKey(0)

        # "features" stack: (num_layer-1) x [Linear + ReLU]; Identity if num_layer==1.
        self.weights = []   # list of (din, dout) f32, transposed vs PyTorch
        self.biases = []
        if num_layer == 1:
            h_dim = in_features
        else:
            h_dim = hidden_dim
            layer_dims = [(in_features, hidden_dim)] + \
                         [(hidden_dim, hidden_dim)] * (num_layer - 2)
            for (din, dout) in layer_dims:
                key, k_w, k_b = jax.random.split(key, 3)
                bound = 1.0 / (din ** 0.5)   # PyTorch Linear default init range
                self.weights.append(jax.random.uniform(
                    k_w, (din, dout), jnp.float32, -bound, bound))
                self.biases.append(jax.random.uniform(
                    k_b, (dout,), jnp.float32, -bound, bound))
        self.hidden_dim = h_dim

        # "head"
        key, k_w, k_b = jax.random.split(key, 3)
        bound = 1.0 / (h_dim ** 0.5)
        self.weights.append(jax.random.uniform(
            k_w, (h_dim, num_classes), jnp.float32, -bound, bound))
        self.biases.append(jax.random.uniform(
            k_b, (num_classes,), jnp.float32, -bound, bound))

        # ---- one-time pad + cast of all parameters (kept on device) ----
        dims = [_round_up(in_features, 128)]
        for w in self.weights:
            dims.append(_round_up(w.shape[1], 128))
        self._dims = tuple(dims)

        packed = []
        for li, (w, b) in enumerate(zip(self.weights, self.biases)):
            din, dout = w.shape
            din_p, dout_p = dims[li], dims[li + 1]
            w_p = jnp.zeros((din_p, dout_p), jnp.bfloat16).at[:din, :dout].set(
                w.astype(jnp.bfloat16))
            b_p = jnp.zeros((1, dout_p), jnp.float32).at[0, :dout].set(
                b.astype(jnp.float32))
            packed.extend([w_p, b_p])
        self._packed = tuple(jax.block_until_ready(p) for p in packed)

    def __call__(self, feature, get_inter=False):
        # torch.flatten(feature, 1)
        x = feature.reshape(feature.shape[0], -1).astype(jnp.float32)
        # ReverseLayerF.apply(x, alpha) is identity in forward.

        if len(self.weights) == 1:
            # features = Identity; hidden is the flattened input itself.
            out = mlp_forward_pallas(x, *self._packed, dims=self._dims,
                                     out_dim=self.out_dim,
                                     hid_dim=self.in_features,
                                     emit_hidden=False)
            out = jnp.squeeze(out)
            return (x, out) if get_inter else out

        if get_inter:
            out, h = mlp_forward_pallas(x, *self._packed, dims=self._dims,
                                        out_dim=self.out_dim,
                                        hid_dim=self.hidden_dim,
                                        emit_hidden=True)
            return h, jnp.squeeze(out)   # h is bf16 (halved HBM writeback)

        out = mlp_forward_pallas(x, *self._packed, dims=self._dims,
                                 out_dim=self.out_dim,
                                 hid_dim=self.hidden_dim,
                                 emit_hidden=False)
        return jnp.squeeze(out)


# ------------------------------------ main ------------------------------------

if __name__ == "__main__":
    key = jax.random.PRNGKey(0)
    k_in, k_params = jax.random.split(key)

    # small shapes: batch=2, channels=4, spatial=16x16 -> 1024 flattened features
    feature_size = (4, 16, 16)
    batch = 2
    hidden_dim = 32
    num_classes = 8

    x = jax.random.normal(k_in, (batch,) + feature_size, jnp.float32)

    model = MLPPallas(feature_size, hidden_dim, num_classes,
                      num_layer=3, adv=True, adv_lambda=1.0, key=k_params)

    out = model(x)
    out = jax.block_until_ready(out)
    assert out.shape == (batch, num_classes), out.shape

    # loose sanity check vs. pure-JAX f32 reference (kernel matmuls are bf16/f32-acc)
    h_ref = x.reshape(batch, -1)
    for (W, b) in zip(model.weights[:-1], model.biases[:-1]):
        h_ref = jnp.maximum(h_ref @ W + b, 0.0)
    out_ref = jnp.squeeze(h_ref @ model.weights[-1] + model.biases[-1])
    assert jnp.allclose(out, out_ref, rtol=1e-1, atol=1e-1), \
        (jnp.max(jnp.abs(out - out_ref)))

    # also exercise get_inter path
    h, out2 = model(x, get_inter=True)
    jax.block_until_ready((h, out2))
    assert h.shape == (batch, hidden_dim) and out2.shape == (batch, num_classes)

    print("KERNEL_OK")
</pallas_src>

<mosaic_0001>
module attributes {stable_mosaic.version = 11 : i64} {
  func.func @_mlp_fused_kernel(%arg0: i32, %arg1: memref<8x1024xbf16, #tpu.memory_space<vmem>>, %arg2: memref<1024x128xbf16, #tpu.memory_space<vmem>>, %arg3: memref<1x128xf32, #tpu.memory_space<vmem>>, %arg4: memref<128x128xbf16, #tpu.memory_space<vmem>>, %arg5: memref<1x128xf32, #tpu.memory_space<vmem>>, %arg6: memref<128x128xbf16, #tpu.memory_space<vmem>>, %arg7: memref<1x128xf32, #tpu.memory_space<vmem>>, %arg8: memref<8x128xf32, #tpu.memory_space<vmem>>) attributes {dimension_semantics = [#tpu.dimension_semantics<parallel>], iteration_bounds = array<i64: 1>, scalar_prefetch = 0 : i64, scratch_operands = 0 : i64, tpu.core_type = #tpu.core_type<tc>, window_params = [{transform_indices = @transform_0, window_bounds = array<i64: 8, 1024>}, {pipeline_mode = #tpu.pipeline_mode<synchronous>, transform_indices = @transform_1, window_bounds = array<i64: 1024, 128>}, {pipeline_mode = #tpu.pipeline_mode<synchronous>, transform_indices = @transform_2, window_bounds = array<i64: 1, 128>}, {pipeline_mode = #tpu.pipeline_mode<synchronous>, transform_indices = @transform_3, window_bounds = array<i64: 128, 128>}, {pipeline_mode = #tpu.pipeline_mode<synchronous>, transform_indices = @transform_4, window_bounds = array<i64: 1, 128>}, {pipeline_mode = #tpu.pipeline_mode<synchronous>, transform_indices = @transform_5, window_bounds = array<i64: 128, 128>}, {pipeline_mode = #tpu.pipeline_mode<synchronous>, transform_indices = @transform_6, window_bounds = array<i64: 1, 128>}, {transform_indices = @transform_7, window_bounds = array<i64: 8, 128>}]} {
    %c0 = arith.constant 0 : index
    %c0_0 = arith.constant 0 : index
    %0 = vector.load %arg1[%c0, %c0_0] : memref<8x1024xbf16, #tpu.memory_space<vmem>>, vector<8x1024xbf16>
    %c0_1 = arith.constant 0 : index
    %c0_2 = arith.constant 0 : index
    %1 = vector.load %arg2[%c0_1, %c0_2] : memref<1024x128xbf16, #tpu.memory_space<vmem>>, vector<1024x128xbf16>
    %cst = arith.constant dense<0.000000e+00> : vector<8x128xf32>
    %2 = tpu.matmul %0, %1, %cst {dimension_numbers = #tpu.dot_dimension_numbers<[1], [0], [0], [1], [0, 0, 1, 1], [], []>} : vector<8x1024xbf16>, vector<1024x128xbf16>, vector<8x128xf32> -> vector<8x128xf32>
    %c0_3 = arith.constant 0 : index
    %c0_4 = arith.constant 0 : index
    %3 = vector.load %arg3[%c0_3, %c0_4] : memref<1x128xf32, #tpu.memory_space<vmem>>, vector<1x128xf32>
    %4 = vector.broadcast %3 : vector<1x128xf32> to vector<8x128xf32>
    %5 = arith.addf %2, %4 : vector<8x128xf32>
    %cst_5 = arith.constant 0.000000e+00 : f32
    %6 = vector.broadcast %cst_5 : f32 to vector<8x128xf32>
    %7 = arith.maximumf %5, %6 : vector<8x128xf32>
    %8 = arith.truncf %7 : vector<8x128xf32> to vector<8x128xbf16>
    %c0_6 = arith.constant 0 : index
    %c0_7 = arith.constant 0 : index
    %9 = vector.load %arg4[%c0_6, %c0_7] : memref<128x128xbf16, #tpu.memory_space<vmem>>, vector<128x128xbf16>
    %cst_8 = arith.constant dense<0.000000e+00> : vector<8x128xf32>
    %10 = tpu.matmul %8, %9, %cst_8 {dimension_numbers = #tpu.dot_dimension_numbers<[1], [0], [0], [1], [0, 0, 1, 1], [], []>} : vector<8x128xbf16>, vector<128x128xbf16>, vector<8x128xf32> -> vector<8x128xf32>
    %c0_9 = arith.constant 0 : index
    %c0_10 = arith.constant 0 : index
    %11 = vector.load %arg5[%c0_9, %c0_10] : memref<1x128xf32, #tpu.memory_space<vmem>>, vector<1x128xf32>
    %12 = vector.broadcast %11 : vector<1x128xf32> to vector<8x128xf32>
    %13 = arith.addf %10, %12 : vector<8x128xf32>
    %cst_11 = arith.constant 0.000000e+00 : f32
    %14 = vector.broadcast %cst_11 : f32 to vector<8x128xf32>
    %15 = arith.maximumf %13, %14 : vector<8x128xf32>
    %16 = arith.truncf %15 : vector<8x128xf32> to vector<8x128xbf16>
    %c0_12 = arith.constant 0 : index
    %c0_13 = arith.constant 0 : index
    %17 = vector.load %arg6[%c0_12, %c0_13] : memref<128x128xbf16, #tpu.memory_space<vmem>>, vector<128x128xbf16>
    %cst_14 = arith.constant dense<0.000000e+00> : vector<8x128xf32>
    %18 = tpu.matmul %16, %17, %cst_14 {dimension_numbers = #tpu.dot_dimension_numbers<[1], [0], [0], [1], [0, 0, 1, 1], [], []>} : vector<8x128xbf16>, vector<128x128xbf16>, vector<8x128xf32> -> vector<8x128xf32>
    %c0_15 = arith.constant 0 : index
    %c0_16 = arith.constant 0 : index
    %19 = vector.load %arg7[%c0_15, %c0_16] : memref<1x128xf32, #tpu.memory_space<vmem>>, vector<1x128xf32>
    %20 = vector.broadcast %19 : vector<1x128xf32> to vector<8x128xf32>
    %21 = arith.addf %18, %20 : vector<8x128xf32>
    %c0_17 = arith.constant 0 : index
    %c0_18 = arith.constant 0 : index
    %22 = vector.load %arg8[%c0_17, %c0_18] : memref<8x128xf32, #tpu.memory_space<vmem>>, vector<8x128xf32>
    tpu.vector_store %arg8[%c0_17, %c0_18], %21 {strides = array<i32>} : memref<8x128xf32, #tpu.memory_space<vmem>>, vector<8x128xf32>,
    return
  }
  func.func @transform_0(%arg0: i32) -> (i32, i32) {
    %c0_i32 = arith.constant 0 : i32
    %c0_i32_0 = arith.constant 0 : i32
    return %arg0, %c0_i32 : i32, i32
  }
  func.func @transform_1(%arg0: i32) -> (i32, i32) {
    %c0_i32 = arith.constant 0 : i32
    %c0_i32_0 = arith.constant 0 : i32
    %c0_i32_1 = arith.constant 0 : i32
    return %c0_i32, %c0_i32_0 : i32, i32
  }
  func.func @transform_2(%arg0: i32) -> (i32, i32) {
    %c0_i32 = arith.constant 0 : i32
    %c0_i32_0 = arith.constant 0 : i32
    %c0_i32_1 = arith.constant 0 : i32
    return %c0_i32, %c0_i32_0 : i32, i32
  }
  func.func @transform_3(%arg0: i32) -> (i32, i32) {
    %c0_i32 = arith.constant 0 : i32
    %c0_i32_0 = arith.constant 0 : i32
    %c0_i32_1 = arith.constant 0 : i32
    return %c0_i32, %c0_i32_0 : i32, i32
  }
  func.func @transform_4(%arg0: i32) -> (i32, i32) {
    %c0_i32 = arith.constant 0 : i32
    %c0_i32_0 = arith.constant 0 : i32
    %c0_i32_1 = arith.constant 0 : i32
    return %c0_i32, %c0_i32_0 : i32, i32
  }
  func.func @transform_5(%arg0: i32) -> (i32, i32) {
    %c0_i32 = arith.constant 0 : i32
    %c0_i32_0 = arith.constant 0 : i32
    %c0_i32_1 = arith.constant 0 : i32
    return %c0_i32, %c0_i32_0 : i32, i32
  }
  func.func @transform_6(%arg0: i32) -> (i32, i32) {
    %c0_i32 = arith.constant 0 : i32
    %c0_i32_0 = arith.constant 0 : i32
    %c0_i32_1 = arith.constant 0 : i32
    return %c0_i32, %c0_i32_0 : i32, i32
  }
  func.func @transform_7(%arg0: i32) -> (i32, i32) {
    %c0_i32 = arith.constant 0 : i32
    %c0_i32_0 = arith.constant 0 : i32
    return %arg0, %c0_i32 : i32, i32
  }
}

</mosaic_0001>

<llo_original>
// kernel: mlp_forward_pallas.1
$region0: #{mlp_forward_pallas.1}
  #allocation0 [shape = 'u32[]', space=smem, size = 0x4, offset = 0x4, fixed_abs, tag = 'smem constant byte address 0x4 - core index']
  #allocation1 [shape = 'u32[72,128]{1,0:T(1,128)}', space=vmem, size = 0x9000, scoped, tag = 'internal scratch']
  %s0 = inlined_call_operand.vmem [shape: bf16[8,1024], index: 0, kind: input, shape index: {}]
  %s1 = inlined_call_operand.hbm [shape: bf16[1024,128], index: 1, kind: input, shape index: {}]
  %s2 = inlined_call_operand.vmem [shape: f32[1,128], index: 2, kind: input, shape index: {}]
  %s3 = inlined_call_operand.vmem [shape: bf16[128,128], index: 3, kind: input, shape index: {}]
  %s4 = inlined_call_operand.vmem [shape: f32[1,128], index: 4, kind: input, shape index: {}]
  %s5 = inlined_call_operand.hbm [shape: bf16[128,128], index: 5, kind: input, shape index: {}]
  %s6 = inlined_call_operand.vmem [shape: f32[1,128], index: 6, kind: input, shape index: {}]
  %s7 = inlined_call_operand.vmem [shape: f32[8,128], index: 7, kind: output, shape index: {}]
  %s8 = sld [smem:[#allocation0]]
  $region46: #{mlp_forward_pallas.1} parent=0
    _
  %s10 = ssub.s32 1, %s8
  %s11 = scalar_select 0, %s10, %s8
  $region1: #{mlp_forward_pallas.1} parent=0
    #allocation2 [shape = 'u8[262144]{0}', space=vmem, size = 0x40000, scoped, tag = 'input window, operand 1, single buffered']
    #allocation3 [shape = 's32[1]{0}', space=sflag, size = 0x4, scoped, tag = 'scoped memory for mlp_forward_pallas.1']
    #allocation4 [shape = 'u8[32768]{0}', space=vmem, size = 0x8000, scoped, tag = 'input window, operand 5, single buffered']
    #allocation5 [shape = 's32[1]{0}', space=sflag, size = 0x4, scoped, tag = 'scoped memory for mlp_forward_pallas.1']
    %12 = vsyncpa [#allocation3], 0
    %13 = vsyncpa [#allocation5], 0
    // Predicated region
    $region2: #{mlp_forward_pallas.1} parent=1 // pred_check
      _
    $region3: #{mlp_forward_pallas.1} parent=1 // pred_check_branch
      %15 = sbr.rel (0) target = $region5
    $region4: #{mlp_forward_pallas.1} parent=1 // pred_region
      _
    $region5: #{mlp_forward_pallas.1} parent=1 // pred_fallthru
      _
    // Predicated region
    $region6: #{mlp_forward_pallas.1} parent=1 // pred_check
      _
    $region7: #{mlp_forward_pallas.1} parent=1 // pred_check_branch
      %17 = sbr.rel (0) target = $region9
    $region8: #{mlp_forward_pallas.1} parent=1 // pred_region
      %19 = vsyncadd [#allocation3], 0
      %s20 = sshll.u32 %s1, 4
      %s21 = int_to_ptr.hbm [resolvable:$true] %s20
      %s22 = sshll.u32 [#allocation2], 4
      %s23 = int_to_ptr.vmem [resolvable:$true] %s22
      %28 = dma.hbm_to_vmem [thread:$0]  %s21, 8192, %s23, [#allocation3], 64, 64, 4
    $region9: #{mlp_forward_pallas.1} parent=1 // pred_fallthru
      _
    // Predicated region
    $region10: #{mlp_forward_pallas.1} parent=1 // pred_check
      _
    $region11: #{mlp_forward_pallas.1} parent=1 // pred_check_branch
      %30 = sbr.rel (0) target = $region13
    $region12: #{mlp_forward_pallas.1} parent=1 // pred_region
      _
    $region13: #{mlp_forward_pallas.1} parent=1 // pred_fallthru
      _
    // Predicated region
    $region14: #{mlp_forward_pallas.1} parent=1 // pred_check
      _
    $region15: #{mlp_forward_pallas.1} parent=1 // pred_check_branch
      %32 = sbr.rel (0) target = $region17
    $region16: #{mlp_forward_pallas.1} parent=1 // pred_region
      _
    $region17: #{mlp_forward_pallas.1} parent=1 // pred_fallthru
      _
    // Predicated region
    $region18: #{mlp_forward_pallas.1} parent=1 // pred_check
      _
    $region19: #{mlp_forward_pallas.1} parent=1 // pred_check_branch
      %34 = sbr.rel (0) target = $region21
    $region20: #{mlp_forward_pallas.1} parent=1 // pred_region
      _
    $region21: #{mlp_forward_pallas.1} parent=1 // pred_fallthru
      _
    // Predicated region
    $region22: #{mlp_forward_pallas.1} parent=1 // pred_check
      _
    $region23: #{mlp_forward_pallas.1} parent=1 // pred_check_branch
      %36 = sbr.rel (0) target = $region25
    $region24: #{mlp_forward_pallas.1} parent=1 // pred_region
      %38 = vsyncadd [#allocation5], 0
      %s39 = sshll.u32 %s5, 4
      %s40 = int_to_ptr.hbm [resolvable:$true] %s39
      %s41 = sshll.u32 [#allocation4], 4
      %s42 = int_to_ptr.vmem [resolvable:$true] %s41
      %47 = dma.hbm_to_vmem [thread:$0]  %s40, 1024, %s42, [#allocation5], 64, 64, 4
    $region25: #{mlp_forward_pallas.1} parent=1 // pred_fallthru
      _
    // Predicated region
    $region26: #{mlp_forward_pallas.1} parent=1 // pred_check
      _
    $region27: #{mlp_forward_pallas.1} parent=1 // pred_check_branch
      %49 = sbr.rel (0) target = $region29
    $region28: #{mlp_forward_pallas.1} parent=1 // pred_region
      _
    $region29: #{mlp_forward_pallas.1} parent=1 // pred_fallthru
      _
    // Predicated region
    $region30: #{mlp_forward_pallas.1} parent=1 // pred_check
      _
    $region31: #{mlp_forward_pallas.1} parent=1 // pred_check_branch
      %51 = sbr.rel (0) target = $region33
    $region32: #{mlp_forward_pallas.1} parent=1 // pred_region
      %53 = dma.done [#allocation3], 8192
    $region33: #{mlp_forward_pallas.1} parent=1 // pred_fallthru
      _
    // Predicated region
    $region34: #{mlp_forward_pallas.1} parent=1 // pred_check
      _
    $region35: #{mlp_forward_pallas.1} parent=1 // pred_check_branch
      %55 = sbr.rel (0) target = $region37
    $region36: #{mlp_forward_pallas.1} parent=1 // pred_region
      %57 = dma.done [#allocation5], 1024
    $region37: #{mlp_forward_pallas.1} parent=1 // pred_fallthru
      _
    %v58 = vld [vmem:[%s0] sm:$0xff]
    %v59 = vld [vmem:[%s0 + $0x8] sm:$0xff]
    %v60 = vld [vmem:[%s0 + $0x10] sm:$0xff]
    %v61 = vld [vmem:[%s0 + $0x18] sm:$0xff]
    %v62 = vld [vmem:[#allocation2] sm:$0xf]
    %v63 = vld [vmem:[#allocation2 + $0x4] sm:$0xf]
    %v64 = vld [vmem:[#allocation2 + $0x8] sm:$0xf]
    %v65 = vld [vmem:[#allocation2 + $0xc] sm:$0xf]
    %v66 = vld [vmem:[#allocation2 + $0x10] sm:$0xf]
    %v67 = vld [vmem:[#allocation2 + $0x14] sm:$0xf]
    %v68 = vld [vmem:[#allocation2 + $0x18] sm:$0xf]
    %v69 = vld [vmem:[#allocation2 + $0x1c] sm:$0xf]
    %v70 = vld [vmem:[#allocation2 + $0x20] sm:$0xf]
    %v71 = vld [vmem:[#allocation2 + $0x24] sm:$0xf]
    %v72 = vld [vmem:[#allocation2 + $0x28] sm:$0xf]
    %v73 = vld [vmem:[#allocation2 + $0x2c] sm:$0xf]
    %v74 = vld [vmem:[#allocation2 + $0x30] sm:$0xf]
    %v75 = vld [vmem:[#allocation2 + $0x34] sm:$0xf]
    %v76 = vld [vmem:[#allocation2 + $0x38] sm:$0xf]
    %v77 = vld [vmem:[#allocation2 + $0x3c] sm:$0xf]
    %v78 = vld [vmem:[#allocation2 + $0x40] sm:$0xf]
    %v79 = vld [vmem:[#allocation2 + $0x44] sm:$0xf]
    %v80 = vld [vmem:[#allocation2 + $0x48] sm:$0xf]
    %v81 = vld [vmem:[#allocation2 + $0x4c] sm:$0xf]
    %v82 = vld [vmem:[#allocation2 + $0x50] sm:$0xf]
    %v83 = vld [vmem:[#allocation2 + $0x54] sm:$0xf]
    %v84 = vld [vmem:[#allocation2 + $0x58] sm:$0xf]
    %v85 = vld [vmem:[#allocation2 + $0x5c] sm:$0xf]
    %v86 = vld [vmem:[#allocation2 + $0x60] sm:$0xf]
    %v87 = vld [vmem:[#allocation2 + $0x64] sm:$0xf]
    %v88 = vld [vmem:[#allocation2 + $0x68] sm:$0xf]
    %v89 = vld [vmem:[#allocation2 + $0x6c] sm:$0xf]
    %v90 = vld [vmem:[#allocation2 + $0x70] sm:$0xf]
    %v91 = vld [vmem:[#allocation2 + $0x74] sm:$0xf]
    %v92 = vld [vmem:[#allocation2 + $0x78] sm:$0xf]
    %v93 = vld [vmem:[#allocation2 + $0x7c] sm:$0xf]
    %v94 = vld [vmem:[#allocation2 + $0x80] sm:$0xf]
    %v95 = vld [vmem:[#allocation2 + $0x84] sm:$0xf]
    %v96 = vld [vmem:[#allocation2 + $0x88] sm:$0xf]
    %v97 = vld [vmem:[#allocation2 + $0x8c] sm:$0xf]
    %v98 = vld [vmem:[#allocation2 + $0x90] sm:$0xf]
    %v99 = vld [vmem:[#allocation2 + $0x94] sm:$0xf]
    %v100 = vld [vmem:[#allocation2 + $0x98] sm:$0xf]
    %v101 = vld [vmem:[#allocation2 + $0x9c] sm:$0xf]
    %v102 = vld [vmem:[#allocation2 + $0xa0] sm:$0xf]
    %v103 = vld [vmem:[#allocation2 + $0xa4] sm:$0xf]
    %v104 = vld [vmem:[#allocation2 + $0xa8] sm:$0xf]
    %v105 = vld [vmem:[#allocation2 + $0xac] sm:$0xf]
    %v106 = vld [vmem:[#allocation2 + $0xb0] sm:$0xf]
    %v107 = vld [vmem:[#allocation2 + $0xb4] sm:$0xf]
    %v108 = vld [vmem:[#allocation2 + $0xb8] sm:$0xf]
    %v109 = vld [vmem:[#allocation2 + $0xbc] sm:$0xf]
    %v110 = vld [vmem:[#allocation2 + $0xc0] sm:$0xf]
    %v111 = vld [vmem:[#allocation2 + $0xc4] sm:$0xf]
    %v112 = vld [vmem:[#allocation2 + $0xc8] sm:$0xf]
    %v113 = vld [vmem:[#allocation2 + $0xcc] sm:$0xf]
    %v114 = vld [vmem:[#allocation2 + $0xd0] sm:$0xf]
    %v115 = vld [vmem:[#allocation2 + $0xd4] sm:$0xf]
    %v116 = vld [vmem:[#allocation2 + $0xd8] sm:$0xf]
    %v117 = vld [vmem:[#allocation2 + $0xdc] sm:$0xf]
    %v118 = vld [vmem:[#allocation2 + $0xe0] sm:$0xf]
    %v119 = vld [vmem:[#allocation2 + $0xe4] sm:$0xf]
    %v120 = vld [vmem:[#allocation2 + $0xe8] sm:$0xf]
    %v121 = vld [vmem:[#allocation2 + $0xec] sm:$0xf]
    %v122 = vld [vmem:[#allocation2 + $0xf0] sm:$0xf]
    %v123 = vld [vmem:[#allocation2 + $0xf4] sm:$0xf]
    %v124 = vld [vmem:[#allocation2 + $0xf8] sm:$0xf]
    %v125 = vld [vmem:[#allocation2 + $0xfc] sm:$0xf]
    %v126 = vld [vmem:[#allocation2 + $0x100] sm:$0xf]
    %v127 = vld [vmem:[#allocation2 + $0x104] sm:$0xf]
    %v128 = vld [vmem:[#allocation2 + $0x108] sm:$0xf]
    %v129 = vld [vmem:[#allocation2 + $0x10c] sm:$0xf]
    %v130 = vld [vmem:[#allocation2 + $0x110] sm:$0xf]
    %v131 = vld [vmem:[#allocation2 + $0x114] sm:$0xf]
    %v132 = vld [vmem:[#allocation2 + $0x118] sm:$0xf]
    %v133 = vld [vmem:[#allocation2 + $0x11c] sm:$0xf]
    %v134 = vld [vmem:[#allocation2 + $0x120] sm:$0xf]
    %v135 = vld [vmem:[#allocation2 + $0x124] sm:$0xf]
    %v136 = vld [vmem:[#allocation2 + $0x128] sm:$0xf]
    %v137 = vld [vmem:[#allocation2 + $0x12c] sm:$0xf]
    %v138 = vld [vmem:[#allocation2 + $0x130] sm:$0xf]
    %v139 = vld [vmem:[#allocation2 + $0x134] sm:$0xf]
    %v140 = vld [vmem:[#allocation2 + $0x138] sm:$0xf]
    %v141 = vld [vmem:[#allocation2 + $0x13c] sm:$0xf]
    %v142 = vld [vmem:[#allocation2 + $0x140] sm:$0xf]
    %v143 = vld [vmem:[#allocation2 + $0x144] sm:$0xf]
    %v144 = vld [vmem:[#allocation2 + $0x148] sm:$0xf]
    %v145 = vld [vmem:[#allocation2 + $0x14c] sm:$0xf]
    %v146 = vld [vmem:[#allocation2 + $0x150] sm:$0xf]
    %v147 = vld [vmem:[#allocation2 + $0x154] sm:$0xf]
    %v148 = vld [vmem:[#allocation2 + $0x158] sm:$0xf]
    %v149 = vld [vmem:[#allocation2 + $0x15c] sm:$0xf]
    %v150 = vld [vmem:[#allocation2 + $0x160] sm:$0xf]
    %v151 = vld [vmem:[#allocation2 + $0x164] sm:$0xf]
    %v152 = vld [vmem:[#allocation2 + $0x168] sm:$0xf]
    %v153 = vld [vmem:[#allocation2 + $0x16c] sm:$0xf]
    %v154 = vld [vmem:[#allocation2 + $0x170] sm:$0xf]
    %v155 = vld [vmem:[#allocation2 + $0x174] sm:$0xf]
    %v156 = vld [vmem:[#allocation2 + $0x178] sm:$0xf]
    %v157 = vld [vmem:[#allocation2 + $0x17c] sm:$0xf]
    %v158 = vld [vmem:[#allocation2 + $0x180] sm:$0xf]
    %v159 = vld [vmem:[#allocation2 + $0x184] sm:$0xf]
    %v160 = vld [vmem:[#allocation2 + $0x188] sm:$0xf]
    %v161 = vld [vmem:[#allocation2 + $0x18c] sm:$0xf]
    %v162 = vld [vmem:[#allocation2 + $0x190] sm:$0xf]
    %v163 = vld [vmem:[#allocation2 + $0x194] sm:$0xf]
    %v164 = vld [vmem:[#allocation2 + $0x198] sm:$0xf]
    %v165 = vld [vmem:[#allocation2 + $0x19c] sm:$0xf]
    %v166 = vld [vmem:[#allocation2 + $0x1a0] sm:$0xf]
    %v167 = vld [vmem:[#allocation2 + $0x1a4] sm:$0xf]
    %v168 = vld [vmem:[#allocation2 + $0x1a8] sm:$0xf]
    %v169 = vld [vmem:[#allocation2 + $0x1ac] sm:$0xf]
    %v170 = vld [vmem:[#allocation2 + $0x1b0] sm:$0xf]
    %v171 = vld [vmem:[#allocation2 + $0x1b4] sm:$0xf]
    %v172 = vld [vmem:[#allocation2 + $0x1b8] sm:$0xf]
    %v173 = vld [vmem:[#allocation2 + $0x1bc] sm:$0xf]
    %v174 = vld [vmem:[#allocation2 + $0x1c0] sm:$0xf]
    %v175 = vld [vmem:[#allocation2 + $0x1c4] sm:$0xf]
    %v176 = vld [vmem:[#allocation2 + $0x1c8] sm:$0xf]
    %v177 = vld [vmem:[#allocation2 + $0x1cc] sm:$0xf]
    %v178 = vld [vmem:[#allocation2 + $0x1d0] sm:$0xf]
    %v179 = vld [vmem:[#allocation2 + $0x1d4] sm:$0xf]
    %v180 = vld [vmem:[#allocation2 + $0x1d8] sm:$0xf]
    %v181 = vld [vmem:[#allocation2 + $0x1dc] sm:$0xf]
    %v182 = vld [vmem:[#allocation2 + $0x1e0] sm:$0xf]
    %v183 = vld [vmem:[#allocation2 + $0x1e4] sm:$0xf]
    %v184 = vld [vmem:[#allocation2 + $0x1e8] sm:$0xf]
    %v185 = vld [vmem:[#allocation2 + $0x1ec] sm:$0xf]
    %v186 = vld [vmem:[#allocation2 + $0x1f0] sm:$0xf]
    %v187 = vld [vmem:[#allocation2 + $0x1f4] sm:$0xf]
    %v188 = vld [vmem:[#allocation2 + $0x1f8] sm:$0xf]
    %v189 = vld [vmem:[#allocation2 + $0x1fc] sm:$0xf]
    %v190 = vld [vmem:[%s2] sm:$0x1]
    %v192 = vperm.slane %v190, 0
    %v198 = vunpack.c.l.b16 %v58
    %v199 = vunpack.c.h.b16 %v58
    %v200 = vunpack.c.l.b16 %v59
    %v201 = vunpack.c.h.b16 %v59
    %v202 = vunpack.c.l.b16 %v60
    %v203 = vunpack.c.h.b16 %v60
    %v204 = vunpack.c.l.b16 %v61
    %v205 = vunpack.c.h.b16 %v61
    %v206 = vpack.c.b16 %v198, %v198
    %v207 = vpack.c.b16 %v199, %v199
    %v208 = vpack.c.b16 %v200, %v200
    %v209 = vpack.c.b16 %v201, %v201
    %v210 = vpack.c.b16 %v202, %v202
    %v211 = vpack.c.b16 %v203, %v203
    %v212 = vpack.c.b16 %v204, %v204
    %v213 = vpack.c.b16 %v205, %v205
    %v350 = vunpack.c.l.b16 %v62
    %v351 = vunpack.c.l.b16 %v63
    %v352 = vunpack.c.l.b16 %v64
    %v353 = vunpack.c.l.b16 %v65
    %v354 = vunpack.c.l.b16 %v66
    %v355 = vunpack.c.l.b16 %v67
    %v356 = vunpack.c.l.b16 %v68
    %v357 = vunpack.c.l.b16 %v69
    %v358 = vunpack.c.l.b16 %v70
    %v359 = vunpack.c.l.b16 %v71
    %v360 = vunpack.c.l.b16 %v72
    %v361 = vunpack.c.l.b16 %v73
    %v362 = vunpack.c.l.b16 %v74
    %v363 = vunpack.c.l.b16 %v75
    %v364 = vunpack.c.l.b16 %v76
    %v365 = vunpack.c.l.b16 %v77
    %v366 = vunpack.c.l.b16 %v78
    %v367 = vunpack.c.l.b16 %v79
    %v368 = vunpack.c.l.b16 %v80
    %v369 = vunpack.c.l.b16 %v81
    %v370 = vunpack.c.l.b16 %v82
    %v371 = vunpack.c.l.b16 %v83
    %v372 = vunpack.c.l.b16 %v84
    %v373 = vunpack.c.l.b16 %v85
    %v374 = vunpack.c.l.b16 %v86
    %v375 = vunpack.c.l.b16 %v87
    %v376 = vunpack.c.l.b16 %v88
    %v377 = vunpack.c.l.b16 %v89
    %v378 = vunpack.c.l.b16 %v90
    %v379 = vunpack.c.l.b16 %v91
    %v380 = vunpack.c.l.b16 %v92
    %v381 = vunpack.c.l.b16 %v93
    %v382 = vunpack.c.l.b16 %v94
    %v383 = vunpack.c.l.b16 %v95
    %v384 = vunpack.c.l.b16 %v96
    %v385 = vunpack.c.l.b16 %v97
    %v386 = vunpack.c.l.b16 %v98
    %v387 = vunpack.c.l.b16 %v99
    %v388 = vunpack.c.l.b16 %v100
    %v389 = vunpack.c.l.b16 %v101
    %v390 = vunpack.c.l.b16 %v102
    %v391 = vunpack.c.l.b16 %v103
    %v392 = vunpack.c.l.b16 %v104
    %v393 = vunpack.c.l.b16 %v105
    %v394 = vunpack.c.l.b16 %v106
    %v395 = vunpack.c.l.b16 %v107
    %v396 = vunpack.c.l.b16 %v108
    %v397 = vunpack.c.l.b16 %v109
    %v398 = vunpack.c.l.b16 %v110
    %v399 = vunpack.c.l.b16 %v111
    %v400 = vunpack.c.l.b16 %v112
    %v401 = vunpack.c.l.b16 %v113
    %v402 = vunpack.c.l.b16 %v114
    %v403 = vunpack.c.l.b16 %v115
    %v404 = vunpack.c.l.b16 %v116
    %v405 = vunpack.c.l.b16 %v117
    %v406 = vunpack.c.l.b16 %v118
    %v407 = vunpack.c.l.b16 %v119
    %v408 = vunpack.c.l.b16 %v120
    %v409 = vunpack.c.l.b16 %v121
    %v410 = vunpack.c.l.b16 %v122
    %v411 = vunpack.c.l.b16 %v123
    %v412 = vunpack.c.l.b16 %v124
    %v413 = vunpack.c.l.b16 %v125
    %v414 = vunpack.c.l.b16 %v126
    %v415 = vunpack.c.l.b16 %v127
    %v416 = vunpack.c.l.b16 %v128
    %v417 = vunpack.c.l.b16 %v129
    %v418 = vunpack.c.l.b16 %v130
    %v419 = vunpack.c.l.b16 %v131
    %v420 = vunpack.c.l.b16 %v132
    %v421 = vunpack.c.l.b16 %v133
    %v422 = vunpack.c.l.b16 %v134
    %v423 = vunpack.c.l.b16 %v135
    %v424 = vunpack.c.l.b16 %v136
    %v425 = vunpack.c.l.b16 %v137
    %v426 = vunpack.c.l.b16 %v138
    %v427 = vunpack.c.l.b16 %v139
    %v428 = vunpack.c.l.b16 %v140
    %v429 = vunpack.c.l.b16 %v141
    %v430 = vunpack.c.l.b16 %v142
    %v431 = vunpack.c.l.b16 %v143
    %v432 = vunpack.c.l.b16 %v144
    %v433 = vunpack.c.l.b16 %v145
    %v434 = vunpack.c.l.b16 %v146
    %v435 = vunpack.c.l.b16 %v147
    %v436 = vunpack.c.l.b16 %v148
    %v437 = vunpack.c.l.b16 %v149
    %v438 = vunpack.c.l.b16 %v150
    %v439 = vunpack.c.l.b16 %v151
    %v440 = vunpack.c.l.b16 %v152
    %v441 = vunpack.c.l.b16 %v153
    %v442 = vunpack.c.l.b16 %v154
    %v443 = vunpack.c.l.b16 %v155
    %v444 = vunpack.c.l.b16 %v156
    %v445 = vunpack.c.l.b16 %v157
    %v446 = vunpack.c.l.b16 %v158
    %v447 = vunpack.c.l.b16 %v159
    %v448 = vunpack.c.l.b16 %v160
    %v449 = vunpack.c.l.b16 %v161
    %v450 = vunpack.c.l.b16 %v162
    %v451 = vunpack.c.l.b16 %v163
    %v452 = vunpack.c.l.b16 %v164
    %v453 = vunpack.c.l.b16 %v165
    %v454 = vunpack.c.l.b16 %v166
    %v455 = vunpack.c.l.b16 %v167
    %v456 = vunpack.c.l.b16 %v168
    %v457 = vunpack.c.l.b16 %v169
    %v458 = vunpack.c.l.b16 %v170
    %v459 = vunpack.c.l.b16 %v171
    %v460 = vunpack.c.l.b16 %v172
    %v461 = vunpack.c.l.b16 %v173
    %v462 = vunpack.c.l.b16 %v174
    %v463 = vunpack.c.l.b16 %v175
    %v464 = vunpack.c.l.b16 %v176
    %v465 = vunpack.c.l.b16 %v177
    %v466 = vunpack.c.l.b16 %v178
    %v467 = vunpack.c.l.b16 %v179
    %v468 = vunpack.c.l.b16 %v180
    %v469 = vunpack.c.l.b16 %v181
    %v470 = vunpack.c.l.b16 %v182
    %v471 = vunpack.c.l.b16 %v183
    %v472 = vunpack.c.l.b16 %v184
    %v473 = vunpack.c.l.b16 %v185
    %v474 = vunpack.c.l.b16 %v186
    %v475 = vunpack.c.l.b16 %v187
    %v476 = vunpack.c.l.b16 %v188
    %v477 = vunpack.c.l.b16 %v189
    %v478 = vpack.c.b16 %v351, %v350
    %v479 = vpack.c.b16 %v353, %v352
    %v480 = vpack.c.b16 %v355, %v354
    %v481 = vpack.c.b16 %v357, %v356
    %v482 = vpack.c.b16 %v359, %v358
    %v483 = vpack.c.b16 %v361, %v360
    %v484 = vpack.c.b16 %v363, %v362
    %v485 = vpack.c.b16 %v365, %v364
    %v486 = vpack.c.b16 %v367, %v366
    %v487 = vpack.c.b16 %v369, %v368
    %v488 = vpack.c.b16 %v371, %v370
    %v489 = vpack.c.b16 %v373, %v372
    %v490 = vpack.c.b16 %v375, %v374
    %v491 = vpack.c.b16 %v377, %v376
    %v492 = vpack.c.b16 %v379, %v378
    %v493 = vpack.c.b16 %v381, %v380
    %v494 = vpack.c.b16 %v383, %v382
    %v495 = vpack.c.b16 %v385, %v384
    %v496 = vpack.c.b16 %v387, %v386
    %v497 = vpack.c.b16 %v389, %v388
    %v498 = vpack.c.b16 %v391, %v390
    %v499 = vpack.c.b16 %v393, %v392
    %v500 = vpack.c.b16 %v395, %v394
    %v501 = vpack.c.b16 %v397, %v396
    %v502 = vpack.c.b16 %v399, %v398
    %v503 = vpack.c.b16 %v401, %v400
    %v504 = vpack.c.b16 %v403, %v402
    %v505 = vpack.c.b16 %v405, %v404
    %v506 = vpack.c.b16 %v407, %v406
    %v507 = vpack.c.b16 %v409, %v408
    %v508 = vpack.c.b16 %v411, %v410
    %v509 = vpack.c.b16 %v413, %v412
    %v510 = vpack.c.b16 %v415, %v414
    %v511 = vpack.c.b16 %v417, %v416
    %v512 = vpack.c.b16 %v419, %v418
    %v513 = vpack.c.b16 %v421, %v420
    %v514 = vpack.c.b16 %v423, %v422
    %v515 = vpack.c.b16 %v425, %v424
    %v516 = vpack.c.b16 %v427, %v426
    %v517 = vpack.c.b16 %v429, %v428
    %v518 = vpack.c.b16 %v431, %v430
    %v519 = vpack.c.b16 %v433, %v432
    %v520 = vpack.c.b16 %v435, %v434
    %v521 = vpack.c.b16 %v437, %v436
    %v522 = vpack.c.b16 %v439, %v438
    %v523 = vpack.c.b16 %v441, %v440
    %v524 = vpack.c.b16 %v443, %v442
    %v525 = vpack.c.b16 %v445, %v444
    %v526 = vpack.c.b16 %v447, %v446
    %v527 = vpack.c.b16 %v449, %v448
    %v528 = vpack.c.b16 %v451, %v450
    %v529 = vpack.c.b16 %v453, %v452
    %v530 = vpack.c.b16 %v455, %v454
    %v531 = vpack.c.b16 %v457, %v456
    %v532 = vpack.c.b16 %v459, %v458
    %v533 = vpack.c.b16 %v461, %v460
    %v534 = vpack.c.b16 %v463, %v462
    %v535 = vpack.c.b16 %v465, %v464
    %v536 = vpack.c.b16 %v467, %v466
    %v537 = vpack.c.b16 %v469, %v468
    %v538 = vpack.c.b16 %v471, %v470
    %v539 = vpack.c.b16 %v473, %v472
    %v540 = vpack.c.b16 %v475, %v474
    %v541 = vpack.c.b16 %v477, %v476
    %606 = vmatpush.bf16.msra.mxu0 %v485
    %607 = vmatpush.bf16.msra.mxu0 %v484
    %608 = vmatpush.bf16.msra.mxu0 %v483
    %609 = vmatpush.bf16.msra.mxu0 %v482
    %610 = vmatpush.bf16.msra.mxu0 %v481
    %611 = vmatpush.bf16.msra.mxu0 %v480
    %612 = vmatpush.bf16.msra.mxu0 %v479
    %613 = vmatpush.bf16.msra.mxu0 %v478
    %614 = vmatmul.bf16.gmra.mxu0 %v206
    %v615 = vpop.f32.mrf.mxu0
    %v616 = vadd.f32 %v192, %v615
    %v617 = vpop.f32.mrf.mxu0
    %618 = vdwg.mxu0
    %619 = vmatpush.bf16.msra.mxu0 %v493
    %620 = vmatpush.bf16.msra.mxu0 %v492
    %621 = vmatpush.bf16.msra.mxu0 %v491
    %622 = vmatpush.bf16.msra.mxu0 %v490
    %623 = vmatpush.bf16.msra.mxu0 %v489
    %624 = vmatpush.bf16.msra.mxu0 %v488
    %625 = vmatpush.bf16.msra.mxu0 %v487
    %626 = vmatpush.bf16.msra.mxu0 %v486
    %627 = vmatmul.bf16.gmra.mxu0 %v207
    %v628 = vpop.f32.mrf.mxu0
    %v629 = vadd.f32 %v616, %v628
    %v630 = vpop.f32.mrf.mxu0
    %631 = vdwg.mxu0
    %632 = vmatpush.bf16.msra.mxu0 %v501
    %633 = vmatpush.bf16.msra.mxu0 %v500
    %634 = vmatpush.bf16.msra.mxu0 %v499
    %635 = vmatpush.bf16.msra.mxu0 %v498
    %636 = vmatpush.bf16.msra.mxu0 %v497
    %637 = vmatpush.bf16.msra.mxu0 %v496
    %638 = vmatpush.bf16.msra.mxu0 %v495
    %639 = vmatpush.bf16.msra.mxu0 %v494
    %640 = vmatmul.bf16.gmra.mxu0 %v208
    %v641 = vpop.f32.mrf.mxu0
    %v642 = vadd.f32 %v629, %v641
    %v643 = vpop.f32.mrf.mxu0
    %644 = vdwg.mxu0
    %645 = vmatpush.bf16.msra.mxu0 %v509
    %646 = vmatpush.bf16.msra.mxu0 %v508
    %647 = vmatpush.bf16.msra.mxu0 %v507
    %648 = vmatpush.bf16.msra.mxu0 %v506
    %649 = vmatpush.bf16.msra.mxu0 %v505
    %650 = vmatpush.bf16.msra.mxu0 %v504
    %651 = vmatpush.bf16.msra.mxu0 %v503
    %652 = vmatpush.bf16.msra.mxu0 %v502
    %653 = vmatmul.bf16.gmra.mxu0 %v209
    %v654 = vpop.f32.mrf.mxu0
    %v655 = vadd.f32 %v642, %v654
    %v656 = vpop.f32.mrf.mxu0
    %657 = vdwg.mxu0
    %658 = vmatpush.bf16.msra.mxu0 %v517
    %659 = vmatpush.bf16.msra.mxu0 %v516
    %660 = vmatpush.bf16.msra.mxu0 %v515
    %661 = vmatpush.bf16.msra.mxu0 %v514
    %662 = vmatpush.bf16.msra.mxu0 %v513
    %663 = vmatpush.bf16.msra.mxu0 %v512
    %664 = vmatpush.bf16.msra.mxu0 %v511
    %665 = vmatpush.bf16.msra.mxu0 %v510
    %666 = vmatmul.bf16.gmra.mxu0 %v210
    %v667 = vpop.f32.mrf.mxu0
    %v668 = vadd.f32 %v655, %v667
    %v669 = vpop.f32.mrf.mxu0
    %670 = vdwg.mxu0
    %671 = vmatpush.bf16.msra.mxu0 %v525
    %672 = vmatpush.bf16.msra.mxu0 %v524
    %673 = vmatpush.bf16.msra.mxu0 %v523
    %674 = vmatpush.bf16.msra.mxu0 %v522
    %675 = vmatpush.bf16.msra.mxu0 %v521
    %676 = vmatpush.bf16.msra.mxu0 %v520
    %677 = vmatpush.bf16.msra.mxu0 %v519
    %678 = vmatpush.bf16.msra.mxu0 %v518
    %679 = vmatmul.bf16.gmra.mxu0 %v211
    %v680 = vpop.f32.mrf.mxu0
    %v681 = vadd.f32 %v668, %v680
    %v682 = vpop.f32.mrf.mxu0
    %683 = vdwg.mxu0
    %684 = vmatpush.bf16.msra.mxu0 %v533
    %685 = vmatpush.bf16.msra.mxu0 %v532
    %686 = vmatpush.bf16.msra.mxu0 %v531
    %687 = vmatpush.bf16.msra.mxu0 %v530
    %688 = vmatpush.bf16.msra.mxu0 %v529
    %689 = vmatpush.bf16.msra.mxu0 %v528
    %690 = vmatpush.bf16.msra.mxu0 %v527
    %691 = vmatpush.bf16.msra.mxu0 %v526
    %692 = vmatmul.bf16.gmra.mxu0 %v212
    %v693 = vpop.f32.mrf.mxu0
    %v694 = vadd.f32 %v681, %v693
    %v695 = vpop.f32.mrf.mxu0
    %696 = vdwg.mxu0
    %697 = vmatpush.bf16.msra.mxu0 %v541
    %698 = vmatpush.bf16.msra.mxu0 %v540
    %699 = vmatpush.bf16.msra.mxu0 %v539
    %700 = vmatpush.bf16.msra.mxu0 %v538
    %701 = vmatpush.bf16.msra.mxu0 %v537
    %702 = vmatpush.bf16.msra.mxu0 %v536
    %703 = vmatpush.bf16.msra.mxu0 %v535
    %704 = vmatpush.bf16.msra.mxu0 %v534
    %705 = vmatmul.bf16.gmra.mxu0 %v213
    %v706 = vpop.f32.mrf.mxu0
    %v707 = vadd.f32 %v694, %v706
    %v708 = vpop.f32.mrf.mxu0
    %709 = vdwg.mxu0
    %v710 = vmax.f32 %v707, 0.0
    %v711 = vpack.c.bf16 %v710, %v710
    %v712 = vld [vmem:[%s3] sm:$0xf]
    %v713 = vld [vmem:[%s3 + $0x4] sm:$0xf]
    %v714 = vld [vmem:[%s3 + $0x8] sm:$0xf]
    %v715 = vld [vmem:[%s3 + $0xc] sm:$0xf]
    %v716 = vld [vmem:[%s3 + $0x10] sm:$0xf]
    %v717 = vld [vmem:[%s3 + $0x14] sm:$0xf]
    %v718 = vld [vmem:[%s3 + $0x18] sm:$0xf]
    %v719 = vld [vmem:[%s3 + $0x1c] sm:$0xf]
    %v720 = vld [vmem:[%s3 + $0x20] sm:$0xf]
    %v721 = vld [vmem:[%s3 + $0x24] sm:$0xf]
    %v722 = vld [vmem:[%s3 + $0x28] sm:$0xf]
    %v723 = vld [vmem:[%s3 + $0x2c] sm:$0xf]
    %v724 = vld [vmem:[%s3 + $0x30] sm:$0xf]
    %v725 = vld [vmem:[%s3 + $0x34] sm:$0xf]
    %v726 = vld [vmem:[%s3 + $0x38] sm:$0xf]
    %v727 = vld [vmem:[%s3 + $0x3c] sm:$0xf]
    %v728 = vld [vmem:[%s4] sm:$0x1]
    %v730 = vperm.slane %v728, 0
    %v748 = vunpack.c.l.b16 %v712
    %v749 = vunpack.c.l.b16 %v713
    %v750 = vunpack.c.l.b16 %v714
    %v751 = vunpack.c.l.b16 %v715
    %v752 = vunpack.c.l.b16 %v716
    %v753 = vunpack.c.l.b16 %v717
    %v754 = vunpack.c.l.b16 %v718
    %v755 = vunpack.c.l.b16 %v719
    %v756 = vunpack.c.l.b16 %v720
    %v757 = vunpack.c.l.b16 %v721
    %v758 = vunpack.c.l.b16 %v722
    %v759 = vunpack.c.l.b16 %v723
    %v760 = vunpack.c.l.b16 %v724
    %v761 = vunpack.c.l.b16 %v725
    %v762 = vunpack.c.l.b16 %v726
    %v763 = vunpack.c.l.b16 %v727
    %v764 = vpack.c.b16 %v749, %v748
    %v765 = vpack.c.b16 %v751, %v750
    %v766 = vpack.c.b16 %v753, %v752
    %v767 = vpack.c.b16 %v755, %v754
    %v768 = vpack.c.b16 %v757, %v756
    %v769 = vpack.c.b16 %v759, %v758
    %v770 = vpack.c.b16 %v761, %v760
    %v771 = vpack.c.b16 %v763, %v762
    %780 = vmatpush.bf16.msra.mxu0 %v771
    %781 = vmatpush.bf16.msra.mxu0 %v770
    %782 = vmatpush.bf16.msra.mxu0 %v769
    %783 = vmatpush.bf16.msra.mxu0 %v768
    %784 = vmatpush.bf16.msra.mxu0 %v767
    %785 = vmatpush.bf16.msra.mxu0 %v766
    %786 = vmatpush.bf16.msra.mxu0 %v765
    %787 = vmatpush.bf16.msra.mxu0 %v764
    %788 = vmatmul.bf16.gmra.mxu0 %v711
    %v789 = vpop.f32.mrf.mxu0
    %v790 = vadd.f32 %v730, %v789
    %v791 = vpop.f32.mrf.mxu0
    %792 = vdwg.mxu0
    %v793 = vmax.f32 %v790, 0.0
    %v794 = vpack.c.bf16 %v793, %v793
    %v795 = vld [vmem:[#allocation4] sm:$0xf]
    %v796 = vld [vmem:[#allocation4 + $0x4] sm:$0xf]
    %v797 = vld [vmem:[#allocation4 + $0x8] sm:$0xf]
    %v798 = vld [vmem:[#allocation4 + $0xc] sm:$0xf]
    %v799 = vld [vmem:[#allocation4 + $0x10] sm:$0xf]
    %v800 = vld [vmem:[#allocation4 + $0x14] sm:$0xf]
    %v801 = vld [vmem:[#allocation4 + $0x18] sm:$0xf]
    %v802 = vld [vmem:[#allocation4 + $0x1c] sm:$0xf]
    %v803 = vld [vmem:[#allocation4 + $0x20] sm:$0xf]
    %v804 = vld [vmem:[#allocation4 + $0x24] sm:$0xf]
    %v805 = vld [vmem:[#allocation4 + $0x28] sm:$0xf]
    %v806 = vld [vmem:[#allocation4 + $0x2c] sm:$0xf]
    %v807 = vld [vmem:[#allocation4 + $0x30] sm:$0xf]
    %v808 = vld [vmem:[#allocation4 + $0x34] sm:$0xf]
    %v809 = vld [vmem:[#allocation4 + $0x38] sm:$0xf]
    %v810 = vld [vmem:[#allocation4 + $0x3c] sm:$0xf]
    %v811 = vld [vmem:[%s6] sm:$0x1]
    %v813 = vperm.slane %v811, 0
    %v831 = vunpack.c.l.b16 %v795
    %v832 = vunpack.c.l.b16 %v796
    %v833 = vunpack.c.l.b16 %v797
    %v834 = vunpack.c.l.b16 %v798
    %v835 = vunpack.c.l.b16 %v799
    %v836 = vunpack.c.l.b16 %v800
    %v837 = vunpack.c.l.b16 %v801
    %v838 = vunpack.c.l.b16 %v802
    %v839 = vunpack.c.l.b16 %v803
    %v840 = vunpack.c.l.b16 %v804
    %v841 = vunpack.c.l.b16 %v805
    %v842 = vunpack.c.l.b16 %v806
    %v843 = vunpack.c.l.b16 %v807
    %v844 = vunpack.c.l.b16 %v808
    %v845 = vunpack.c.l.b16 %v809
    %v846 = vunpack.c.l.b16 %v810
    %v847 = vpack.c.b16 %v832, %v831
    %v848 = vpack.c.b16 %v834, %v833
    %v849 = vpack.c.b16 %v836, %v835
    %v850 = vpack.c.b16 %v838, %v837
    %v851 = vpack.c.b16 %v840, %v839
    %v852 = vpack.c.b16 %v842, %v841
    %v853 = vpack.c.b16 %v844, %v843
    %v854 = vpack.c.b16 %v846, %v845
    %863 = vmatpush.bf16.msra.mxu0 %v854
    %864 = vmatpush.bf16.msra.mxu0 %v853
    %865 = vmatpush.bf16.msra.mxu0 %v852
    %866 = vmatpush.bf16.msra.mxu0 %v851
    %867 = vmatpush.bf16.msra.mxu0 %v850
    %868 = vmatpush.bf16.msra.mxu0 %v849
    %869 = vmatpush.bf16.msra.mxu0 %v848
    %870 = vmatpush.bf16.msra.mxu0 %v847
    %871 = vmatmul.bf16.gmra.mxu0 %v794
    %v872 = vpop.f32.mrf.mxu0
    %v873 = vadd.f32 %v813, %v872
    %v874 = vpop.f32.mrf.mxu0
    %875 = vdwg.mxu0
    %876 = vst [vmem:[%s7] sm:$0xff] %v873
    // Predicated region
    $region38: #{mlp_forward_pallas.1} parent=1 // pred_check
      _
    $region39: #{mlp_forward_pallas.1} parent=1 // pred_check_branch
      %878 = sbr.rel (0) target = $region41
    $region40: #{mlp_forward_pallas.1} parent=1 // pred_region
      _
    $region41: #{mlp_forward_pallas.1} parent=1 // pred_fallthru
      _
    // Predicated region
    $region42: #{mlp_forward_pallas.1} parent=1 // pred_check
      _
    $region43: #{mlp_forward_pallas.1} parent=1 // pred_check_branch
      %880 = sbr.rel (0) target = $region45
    $region44: #{mlp_forward_pallas.1} parent=1 // pred_region
      _
    $region45: #{mlp_forward_pallas.1} parent=1 // pred_fallthru
      _
    %881 = vsyncpa [#allocation3], 1
    %882 = vsyncpa [#allocation5], 1

</llo_original>
